<compile_context>
chip_gen: v5e
topology: v5e:2x2
jax: 0.10.0
libtpu: 0.0.40
codegen_flags: <defaults>
</compile_context>

<pallas_src>
import functools

import jax
import jax.numpy as jnp
from jax.experimental import pallas as pl
from jax.experimental.pallas import tpu as pltpu


def _scale_bias_kernel(x_ref, w_ref, b_ref, o_ref):
    # x_ref: (tile_rows, H*W);  w_ref/b_ref: (tile_rows, 1) -> lane broadcast.
    o_ref[...] = x_ref[...] * w_ref[...] + b_ref[...]


@functools.partial(jax.jit, static_argnames=("target_block_bytes",))
def scale_bias_nchw(x, weight, bias, *, target_block_bytes=1 << 20):
    """x: (N, C, H, W); weight, bias: (C,).  Returns (N, C, H, W)."""
    N, C, H, W = x.shape
    rows, cols = N * C, H * W

    # Pure reshape (contiguous) -- no HBM round trip, unlike a transpose.
    x2d = x.reshape(rows, cols)

    # Per-row scale/bias columns: row n*C + c gets weight[c] / bias[c].
    w_col = jnp.tile(weight.astype(x.dtype), N).reshape(rows, 1)
    b_col = jnp.tile(bias.astype(x.dtype), N).reshape(rows, 1)

    # Row-tile sizing: ~target_block_bytes per x tile, multiple of 8 sublanes,
    # or the full row extent for small problems (single block, no grid overhead).
    itemsize = jnp.dtype(x.dtype).itemsize
    bytes_per_row = cols * itemsize
    max_rows_by_bytes = max(1, target_block_bytes // max(bytes_per_row, 1))
    if max_rows_by_bytes >= rows:
        tile_rows = rows                       # whole slab in one block
    else:
        tile_rows = max(8, (max_rows_by_bytes // 8) * 8)

    grid = (pl.cdiv(rows, tile_rows),)

    out2d = pl.pallas_call(
        _scale_bias_kernel,
        out_shape=jax.ShapeDtypeStruct((rows, cols), x.dtype),
        grid_spec=pltpu.PrefetchScalarGridSpec(
            num_scalar_prefetch=0,
            grid=grid,
            in_specs=[
                pl.BlockSpec((tile_rows, cols), lambda i: (i, 0)),  # x tile (lane-dense)
                pl.BlockSpec((tile_rows, 1), lambda i: (i, 0)),     # per-row weight
                pl.BlockSpec((tile_rows, 1), lambda i: (i, 0)),     # per-row bias
            ],
            out_specs=pl.BlockSpec((tile_rows, cols), lambda i: (i, 0)),
        ),
        compiler_params=pltpu.CompilerParams(
            dimension_semantics=("parallel",)),
    )(x2d, w_col, b_col)

    # Pure reshape back to NCHW -- again no data movement.
    return out2d.reshape(N, C, H, W)


if __name__ == "__main__":
    # Module config (matches ScaleBias(num_features=C, bias=True)).
    N, C, H, W = 2, 4, 16, 16

    key = jax.random.PRNGKey(0)
    kx, kw, kb = jax.random.split(key, 3)
    x = jax.random.normal(kx, (N, C, H, W), dtype=jnp.float32)

    # 1) Deterministic parameter init exactly as the module's __init__.
    weight = jnp.ones((C,), dtype=jnp.float32)
    bias = jnp.zeros((C,), dtype=jnp.float32)
    out = jax.block_until_ready(scale_bias_nchw(x, weight, bias))
    ref = x * weight.reshape(1, C, 1, 1) + bias.reshape(1, C, 1, 1)
    assert out.shape == (N, C, H, W)
    assert jnp.allclose(out, ref, atol=1e-6), "mismatch vs reference (init params)"

    # 2) Stronger numerical check with non-trivial (deterministic) params.
    weight2 = jax.random.normal(kw, (C,), dtype=jnp.float32)
    bias2 = jax.random.normal(kb, (C,), dtype=jnp.float32)
    out2 = jax.block_until_ready(scale_bias_nchw(x, weight2, bias2))
    ref2 = x * weight2.reshape(1, C, 1, 1) + bias2.reshape(1, C, 1, 1)
    assert jnp.allclose(out2, ref2, atol=1e-5), "mismatch vs reference (random params)"

    print("KERNEL_OK")
</pallas_src>

<mosaic_0001>
module attributes {stable_mosaic.version = 11 : i64} {
  func.func @_scale_bias_kernel(%arg0: i32, %arg1: memref<8x256xf32, #tpu.memory_space<vmem>>, %arg2: memref<8x1xf32, #tpu.memory_space<vmem>>, %arg3: memref<8x1xf32, #tpu.memory_space<vmem>>, %arg4: memref<8x256xf32, #tpu.memory_space<vmem>>) attributes {dimension_semantics = [#tpu.dimension_semantics<parallel>], iteration_bounds = array<i64: 1>, scalar_prefetch = 0 : i64, scratch_operands = 0 : i64, tpu.core_type = #tpu.core_type<tc>, window_params = [{transform_indices = @transform_0, window_bounds = array<i64: 8, 256>}, {transform_indices = @transform_1, window_bounds = array<i64: 8, 1>}, {transform_indices = @transform_2, window_bounds = array<i64: 8, 1>}, {transform_indices = @transform_3, window_bounds = array<i64: 8, 256>}]} {
    %c0 = arith.constant 0 : index
    %c0_0 = arith.constant 0 : index
    %0 = vector.load %arg1[%c0, %c0_0] : memref<8x256xf32, #tpu.memory_space<vmem>>, vector<8x256xf32>
    %c0_1 = arith.constant 0 : index
    %c0_2 = arith.constant 0 : index
    %1 = vector.load %arg2[%c0_1, %c0_2] : memref<8x1xf32, #tpu.memory_space<vmem>>, vector<8x1xf32>
    %2 = vector.broadcast %1 : vector<8x1xf32> to vector<8x256xf32>
    %3 = arith.mulf %0, %2 : vector<8x256xf32>
    %c0_3 = arith.constant 0 : index
    %c0_4 = arith.constant 0 : index
    %4 = vector.load %arg3[%c0_3, %c0_4] : memref<8x1xf32, #tpu.memory_space<vmem>>, vector<8x1xf32>
    %5 = vector.broadcast %4 : vector<8x1xf32> to vector<8x256xf32>
    %6 = arith.addf %3, %5 : vector<8x256xf32>
    %c0_5 = arith.constant 0 : index
    %c0_6 = arith.constant 0 : index
    %7 = vector.load %arg4[%c0_5, %c0_6] : memref<8x256xf32, #tpu.memory_space<vmem>>, vector<8x256xf32>
    tpu.vector_store %arg4[%c0_5, %c0_6], %6 {strides = array<i32>} : memref<8x256xf32, #tpu.memory_space<vmem>>, vector<8x256xf32>,
    return
  }
  func.func @transform_0(%arg0: i32) -> (i32, i32) {
    %c0_i32 = arith.constant 0 : i32
    %c0_i32_0 = arith.constant 0 : i32
    return %arg0, %c0_i32 : i32, i32
  }
  func.func @transform_1(%arg0: i32) -> (i32, i32) {
    %c0_i32 = arith.constant 0 : i32
    %c0_i32_0 = arith.constant 0 : i32
    return %arg0, %c0_i32 : i32, i32
  }
  func.func @transform_2(%arg0: i32) -> (i32, i32) {
    %c0_i32 = arith.constant 0 : i32
    %c0_i32_0 = arith.constant 0 : i32
    return %arg0, %c0_i32 : i32, i32
  }
  func.func @transform_3(%arg0: i32) -> (i32, i32) {
    %c0_i32 = arith.constant 0 : i32
    %c0_i32_0 = arith.constant 0 : i32
    return %arg0, %c0_i32 : i32, i32
  }
}

</mosaic_0001>

<llo_original>
// kernel: tile.1
$region0: #{tile.1}
  %s0 = inlined_call_operand.vmem [shape: f32[2,4], index: 0, kind: input, shape index: {}]
  %s1 = inlined_call_operand.vmem [shape: f32[8,1], index: 1, kind: output, shape index: {}]
  $region1: #{tile.1} parent=0
    #allocation0 [shape = 'u8[4096]{0}', space=vmem, size = 0x1000, scoped, tag = 'scoped mem for input reshape']
    %s3 = ssub.s32 4, 1
    %v4 = vld [vmem:[%s0] sm:%s3]
    %5 = vst [vmem:[#allocation0] sm:%s3] %v4
    %v6 = vld [vmem:[#allocation0] sm:$0x3]
    %vm7 = vcmask 7168
    %8 = vst.msk [vmem:[%s1] ss:$4 sm:$0x3] %vm7, %v6
    %v9 = vld [vmem:[#allocation0] sm:$0x3]
    %10 = vrot.lane.b32.xlu0 %v9, 127
    %v11 = vpop.permute.xlu0 %10
    %vm12 = vcmask 7168
    %s13 = scalar_lea.vmem %s1, 1
    %14 = vst.msk [vmem:[%s13] ss:$4 sm:$0x3] %vm12, %v11
    %v15 = vld [vmem:[#allocation0] sm:$0x3]
    %16 = vrot.lane.b32.xlu0 %v15, 126
    %v17 = vpop.permute.xlu0 %16
    %vm18 = vcmask 7168
    %s19 = scalar_lea.vmem %s1, 2
    %20 = vst.msk [vmem:[%s19] ss:$4 sm:$0x3] %vm18, %v17
    %v21 = vld [vmem:[#allocation0] sm:$0x3]
    %22 = vrot.lane.b32.xlu0 %v21, 125
    %v23 = vpop.permute.xlu0 %22
    %vm24 = vcmask 7168
    %s25 = scalar_lea.vmem %s1, 3
    %26 = vst.msk [vmem:[%s25] ss:$4 sm:$0x3] %vm24, %v23

// kernel: tile.13
$region0: #{tile.13}
  #allocation2 [shape = 's32[1]{0}', space=sflag, size = 0x4, scoped, tag = 'scoped memory for tile.13']
  %s0 = inlined_call_operand.hbm [shape: f32[4], index: 0, kind: input, shape index: {}]
  %s1 = inlined_call_operand.vmem [shape: f32[2,4], index: 1, kind: output, shape index: {}]
  $region1: #{tile.13} parent=0
    #allocation0 [shape = 'u8[512]{0}', space=vmem, size = 0x400, scoped, tag = 'operand span for operand 0']
    #allocation1 [shape = 's32[1]{0}', space=sflag, size = 0x4, scoped, tag = 'scoped memory for tile.13']
    %2 = vsyncpa [#allocation1], 0
    // Predicated region
    $region2: #{tile.13} parent=1 // pred_check
      _
    $region3: #{tile.13} parent=1 // pred_check_branch
      %4 = sbr.rel (0) target = $region5
    $region4: #{tile.13} parent=1 // pred_region
      %6 = vsyncadd [#allocation1], 0
      %s8 = sshll.u32 %s0, 4
      %s9 = int_to_ptr.hbm [resolvable:$true] %s8
      %s10 = sshll.u32 [#allocation0], 4
      %s11 = int_to_ptr.vmem [resolvable:$true] %s10
      %13 = dma.hbm_to_vmem [thread:$0]  %s9, 16, %s11, [#allocation1]
    $region5: #{tile.13} parent=1 // pred_fallthru
      _
    // Predicated region
    $region6: #{tile.13} parent=1 // pred_check
      _
    $region7: #{tile.13} parent=1 // pred_check_branch
      %15 = sbr.rel (0) target = $region9
    $region8: #{tile.13} parent=1 // pred_region
      %17 = dma.done [#allocation1], 16
    $region9: #{tile.13} parent=1 // pred_fallthru
      _
    %v18 = vld [vmem:[#allocation0] ss:$0 sm:$0xff]
    %19 = vst [vmem:[%s1] sm:$0x3] %v18
    %20 = vsyncpa [#allocation1], 1

// kernel: tile.18
$region0: #{tile.18}
  #allocation0 [shape = 's32[1]{0}', space=sflag, size = 0x4, scoped, tag = 'scoped memory for tile.18']
  %s0 = inlined_call_operand.vmem [shape: f32[4], index: 0, kind: input, shape index: {}]
  %s1 = inlined_call_operand.vmem [shape: f32[2,4], index: 1, kind: output, shape index: {}]
  // Predicated region
  $region2: #{tile.18} parent=0 // pred_check
    _
  $region3: #{tile.18} parent=0 // pred_check_branch
    %3 = sbr.rel (0) target = $region5
  $region4: #{tile.18} parent=0 // pred_region
    _
  $region5: #{tile.18} parent=0 // pred_fallthru
    _
  %v4 = vld [vmem:[%s0] ss:$0 sm:$0xff]
  %5 = vst [vmem:[%s1] sm:$0x3] %v4

// kernel: scale_bias_nchw.1
$region0: #{scale_bias_nchw.1}
  #allocation0 [shape = 'u32[]', space=smem, size = 0x4, offset = 0x4, fixed_abs, tag = 'smem constant byte address 0x4 - core index']
  #allocation1 [shape = 'u32[72,128]{1,0:T(1,128)}', space=vmem, size = 0x9000, scoped, tag = 'internal scratch']
  %s0 = inlined_call_operand.vmem [shape: f32[8,256], index: 0, kind: input, shape index: {}]
  %s1 = inlined_call_operand.vmem [shape: f32[8,1], index: 1, kind: input, shape index: {}]
  %s2 = inlined_call_operand.vmem [shape: f32[8,1], index: 2, kind: input, shape index: {}]
  %s3 = inlined_call_operand.vmem [shape: f32[8,256], index: 3, kind: output, shape index: {}]
  %s4 = sld [smem:[#allocation0]]
  $region22: #{scale_bias_nchw.1} parent=0
    _
  %s6 = ssub.s32 1, %s4
  %s7 = scalar_select 0, %s6, %s4
  // Predicated region
  $region2: #{scale_bias_nchw.1} parent=0 // pred_check
    _
  $region3: #{scale_bias_nchw.1} parent=0 // pred_check_branch
    %9 = sbr.rel (0) target = $region5
  $region4: #{scale_bias_nchw.1} parent=0 // pred_region
    _
  $region5: #{scale_bias_nchw.1} parent=0 // pred_fallthru
    _
  // Predicated region
  $region6: #{scale_bias_nchw.1} parent=0 // pred_check
    _
  $region7: #{scale_bias_nchw.1} parent=0 // pred_check_branch
    %11 = sbr.rel (0) target = $region9
  $region8: #{scale_bias_nchw.1} parent=0 // pred_region
    _
  $region9: #{scale_bias_nchw.1} parent=0 // pred_fallthru
    _
  // Predicated region
  $region10: #{scale_bias_nchw.1} parent=0 // pred_check
    _
  $region11: #{scale_bias_nchw.1} parent=0 // pred_check_branch
    %13 = sbr.rel (0) target = $region13
  $region12: #{scale_bias_nchw.1} parent=0 // pred_region
    _
  $region13: #{scale_bias_nchw.1} parent=0 // pred_fallthru
    _
  %v14 = vld [vmem:[%s0] sm:$0xff]
  %v15 = vld [vmem:[%s0 + $0x8] sm:$0xff]
  %v16 = vld [vmem:[%s1] sm:$0xff]
  %18 = vset.pattern.permute.xlu0 0
  %19 = vperm.xlu0 %18, %v16
  %v20 = vpop.permute.xlu0 %19
  %v22 = vmul.f32 %v14, %v20
  %v23 = vmul.f32 %v15, %v20
  %v24 = vld [vmem:[%s2] sm:$0xff]
  %26 = vset.pattern.permute.xlu0 0
  %27 = vperm.xlu0 %26, %v24
  %v28 = vpop.permute.xlu0 %27
  %v30 = vadd.f32 %v22, %v28
  %v31 = vadd.f32 %v23, %v28
  %32 = vst [vmem:[%s3] sm:$0xff] %v30
  %33 = vst [vmem:[%s3 + $0x8] sm:$0xff] %v31
  // Predicated region
  $region14: #{scale_bias_nchw.1} parent=0 // pred_check
    _
  $region15: #{scale_bias_nchw.1} parent=0 // pred_check_branch
    %35 = sbr.rel (0) target = $region17
  $region16: #{scale_bias_nchw.1} parent=0 // pred_region
    _
  $region17: #{scale_bias_nchw.1} parent=0 // pred_fallthru
    _
  // Predicated region
  $region18: #{scale_bias_nchw.1} parent=0 // pred_check
    _
  $region19: #{scale_bias_nchw.1} parent=0 // pred_check_branch
    %37 = sbr.rel (0) target = $region21
  $region20: #{scale_bias_nchw.1} parent=0 // pred_region
    _
  $region21: #{scale_bias_nchw.1} parent=0 // pred_fallthru
    _

</llo_original>
